<compile_context>
chip_gen: v7x
topology: tpu7x:2x2x1
jax: 0.10.0
libtpu: 0.0.40
codegen_flags: <defaults>
</compile_context>

<pallas_src>
import jax
import jax.numpy as jnp
from jax.experimental import pallas as pl
from jax.experimental.pallas import tpu as pltpu

OUT_PAD = 8  # lane-padded output width (true output width is 3)


def _round_up(n, m):
    return (n + m - 1) // m * m


# --------------------------------------------------------------------------- #
# Kernel
# --------------------------------------------------------------------------- #
def mlp2plus_kernel(x_ref, wbd_ref, bbd_ref, w1_ref, b1_ref,
                    w2_ref, b2_ref, w3_ref, b3_ref, out_ref):
    relu = lambda z: jnp.maximum(z, 0.0)

    x = x_ref[...]                                            # (TILE_B, feat) f32

    # Fused fx/fx/fx/fu/fu + concat == one block-diagonal matmul.
    l1 = relu(jnp.dot(x, wbd_ref[...],
                      preferred_element_type=jnp.float32) + bbd_ref[...])

    h = relu(jnp.dot(l1, w1_ref[...],
                     preferred_element_type=jnp.float32) + b1_ref[...])
    h = relu(jnp.dot(h, w2_ref[...],
                     preferred_element_type=jnp.float32) + b2_ref[...])
    y = jnp.dot(h, w3_ref[...],
                preferred_element_type=jnp.float32) + b3_ref[...]
    out_ref[...] = jax.nn.sigmoid(y)                          # (TILE_B, OUT_PAD)


# --------------------------------------------------------------------------- #
# Wrapper
# --------------------------------------------------------------------------- #
def _build_block_diag(params, n_state, n_control):
    """Wbd (feat, 10): exact fusion of the strided slices + fx/fu + concat."""
    feat = 3 * n_state + 2 * n_control
    wx, wu = params["wx"], params["wu"]                    # (n_state,2), (n_control,2)
    wbd = jnp.zeros((feat, 10), jnp.float32)
    wbd = wbd.at[0:3 * n_state:3, 0:2].set(wx)             # vx block
    wbd = wbd.at[1:3 * n_state:3, 2:4].set(wx)             # vy block
    wbd = wbd.at[2:3 * n_state:3, 4:6].set(wx)             # r  block
    wbd = wbd.at[3 * n_state::2, 6:8].set(wu)              # throttle block
    wbd = wbd.at[3 * n_state + 1::2, 8:10].set(wu)         # steering block
    bbd = jnp.concatenate([params["bx"]] * 3 + [params["bu"]] * 2, axis=-1)  # (1,10)
    return wbd, bbd


def mlp2plus_forward(x, params, n_state, n_control, *, tile_b=2048):
    batch, feat = x.shape
    assert feat == 3 * n_state + 2 * n_control
    neurons = params["w1"].shape[1]

    # ---- parameter preprocessing (once per call, batch-independent, tiny) ----
    wbd, bbd = _build_block_diag(params, n_state, n_control)
    w3p = jnp.zeros((neurons, OUT_PAD), jnp.float32).at[:, :3].set(params["w3"])
    b3p = jnp.zeros((1, OUT_PAD), jnp.float32).at[:, :3].set(params["b3"])

    # ---- batch tiling: multiple-of-8 tile, no wrapper-side padding of x.
    # Pallas handles the ragged final block (OOB writes are discarded).
    tile_b = max(8, _round_up(tile_b, 8))
    if batch > 16:
        # Ensure >= 2 grid steps so the "parallel" batch axis can shard across
        # both TensorCores on v7x (negligible cost on single-TC parts).
        tile_b = min(tile_b, _round_up(pl.cdiv(batch, 2), 8))
    tile_b = min(tile_b, _round_up(batch, 8))
    grid = (pl.cdiv(batch, tile_b),)

    weight_bytes = 4 * (wbd.size + bbd.size
                        + params["w1"].size + params["b1"].size
                        + params["w2"].size + params["b2"].size
                        + w3p.size + b3p.size)
    cost = pl.CostEstimate(
        flops=2 * batch * (feat * 10 + 10 * neurons
                           + neurons * neurons + neurons * OUT_PAD),
        transcendentals=batch * OUT_PAD,
        bytes_accessed=batch * (feat + OUT_PAD) * 4 + weight_bytes,
    )

    const = lambda i: (0, 0)
    out = pl.pallas_call(
        mlp2plus_kernel,
        out_shape=jax.ShapeDtypeStruct((batch, OUT_PAD), jnp.float32),
        grid=grid,
        in_specs=[
            pl.BlockSpec((tile_b, feat), lambda i: (i, 0)),      # x tile
            pl.BlockSpec((feat, 10), const),                     # Wbd
            pl.BlockSpec((1, 10), const),                        # bbd
            pl.BlockSpec((10, neurons), const),                  # w1
            pl.BlockSpec((1, neurons), const),                   # b1
            pl.BlockSpec((neurons, neurons), const),             # w2
            pl.BlockSpec((1, neurons), const),                   # b2
            pl.BlockSpec((neurons, OUT_PAD), const),             # w3 (padded to 8)
            pl.BlockSpec((1, OUT_PAD), const),                   # b3 (padded to 8)
        ],
        out_specs=pl.BlockSpec((tile_b, OUT_PAD), lambda i: (i, 0)),
        compiler_params=pltpu.CompilerParams(
            dimension_semantics=("parallel",)),
        cost_estimate=cost,
    )(x, wbd, bbd, params["w1"], params["b1"], params["w2"], params["b2"],
      w3p, b3p)

    return out[:, :3][:, None, :]   # (batch, 1, 3), matches PyTorch


# --------------------------------------------------------------------------- #
# Params + pure-JAX reference
# --------------------------------------------------------------------------- #
def init_params(key, neurons, n_state, n_control):
    """PyTorch-style U(-1/sqrt(fan_in), 1/sqrt(fan_in)) init; weights are (in, out)."""
    def linear(k, fan_in, fan_out):
        kw, kb = jax.random.split(k)
        bound = 1.0 / float(fan_in) ** 0.5
        w = jax.random.uniform(kw, (fan_in, fan_out), jnp.float32, -bound, bound)
        b = jax.random.uniform(kb, (1, fan_out), jnp.float32, -bound, bound)
        return w, b

    ks = jax.random.split(key, 5)
    wx, bx = linear(ks[0], n_state, 2)
    wu, bu = linear(ks[1], n_control, 2)
    w1, b1 = linear(ks[2], 10, neurons)
    w2, b2 = linear(ks[3], neurons, neurons)
    w3, b3 = linear(ks[4], neurons, 3)
    return dict(wx=wx, bx=bx, wu=wu, bu=bu,
                w1=w1, b1=b1, w2=w2, b2=b2, w3=w3, b3=b3)


def reference_forward(x, params, n_state, n_control):
    relu = lambda z: jnp.maximum(z, 0.0)
    fx = lambda v: relu(v @ params["wx"] + params["bx"])
    fu = lambda v: relu(v @ params["wu"] + params["bu"])
    vx_ = x[:, 0:3 * n_state:3]
    vy_ = x[:, 1:3 * n_state:3]
    r_ = x[:, 2:3 * n_state:3]
    throttle_ = x[:, 3 * n_state::2]
    steering_ = x[:, 3 * n_state + 1::2]
    l1 = jnp.concatenate([fx(vx_), fx(vy_), fx(r_),
                          fu(throttle_), fu(steering_)], axis=-1)
    h = relu(l1 @ params["w1"] + params["b1"])
    h = relu(h @ params["w2"] + params["b2"])
    y = jax.nn.sigmoid(h @ params["w3"] + params["b3"])
    return y[:, None, :]


# --------------------------------------------------------------------------- #
if __name__ == "__main__":
    neurons, steps, n_state, n_control = 32, 8, 3, 2     # steps unused in forward
    feat = 3 * n_state + 2 * n_control                   # 13

    key = jax.random.PRNGKey(0)
    kx, kp, kx2 = jax.random.split(key, 3)
    params = init_params(kp, neurons, n_state, n_control)

    # Small case (batch=8): exact f32 check, single grid step.
    x = jax.random.normal(kx, (8, feat), dtype=jnp.float32)
    y_pred = jax.block_until_ready(mlp2plus_forward(x, params, n_state, n_control))
    y_ref = reference_forward(x, params, n_state, n_control)
    assert y_pred.shape == (8, 1, 3)
    assert jnp.allclose(y_pred, y_ref, atol=1e-5, rtol=1e-5)

    # Non-multiple-of-8 batch: exercises the 2-step grid + ragged final block.
    x2 = jax.random.normal(kx2, (300, feat), dtype=jnp.float32)
    y2 = jax.block_until_ready(mlp2plus_forward(x2, params, n_state, n_control))
    y2_ref = reference_forward(x2, params, n_state, n_control)
    assert y2.shape == (300, 1, 3)
    assert jnp.allclose(y2, y2_ref, atol=1e-5, rtol=1e-5)

    print("KERNEL_OK")
</pallas_src>

<mosaic_0001>
module attributes {stable_mosaic.version = 11 : i64} {
  func.func @mlp2plus_kernel(%arg0: i32, %arg1: memref<8x13xf32, #tpu.memory_space<vmem>>, %arg2: memref<13x10xf32, #tpu.memory_space<vmem>>, %arg3: memref<1x10xf32, #tpu.memory_space<vmem>>, %arg4: memref<10x32xf32, #tpu.memory_space<vmem>>, %arg5: memref<1x32xf32, #tpu.memory_space<vmem>>, %arg6: memref<32x32xf32, #tpu.memory_space<vmem>>, %arg7: memref<1x32xf32, #tpu.memory_space<vmem>>, %arg8: memref<32x8xf32, #tpu.memory_space<vmem>>, %arg9: memref<1x8xf32, #tpu.memory_space<vmem>>, %arg10: memref<8x8xf32, #tpu.memory_space<vmem>>) attributes {dimension_semantics = [#tpu.dimension_semantics<parallel>], iteration_bounds = array<i64: 1>, scalar_prefetch = 0 : i64, scratch_operands = 0 : i64, tpu.core_type = #tpu.core_type<tc>, window_params = [{transform_indices = @transform_0, window_bounds = array<i64: 8, 13>}, {pipeline_mode = #tpu.pipeline_mode<synchronous>, transform_indices = @transform_1, window_bounds = array<i64: 13, 10>}, {pipeline_mode = #tpu.pipeline_mode<synchronous>, transform_indices = @transform_2, window_bounds = array<i64: 1, 10>}, {pipeline_mode = #tpu.pipeline_mode<synchronous>, transform_indices = @transform_3, window_bounds = array<i64: 10, 32>}, {pipeline_mode = #tpu.pipeline_mode<synchronous>, transform_indices = @transform_4, window_bounds = array<i64: 1, 32>}, {pipeline_mode = #tpu.pipeline_mode<synchronous>, transform_indices = @transform_5, window_bounds = array<i64: 32, 32>}, {pipeline_mode = #tpu.pipeline_mode<synchronous>, transform_indices = @transform_6, window_bounds = array<i64: 1, 32>}, {pipeline_mode = #tpu.pipeline_mode<synchronous>, transform_indices = @transform_7, window_bounds = array<i64: 32, 8>}, {pipeline_mode = #tpu.pipeline_mode<synchronous>, transform_indices = @transform_8, window_bounds = array<i64: 1, 8>}, {transform_indices = @transform_9, window_bounds = array<i64: 8, 8>}]} {
    %c0 = arith.constant 0 : index
    %c0_0 = arith.constant 0 : index
    %0 = vector.load %arg1[%c0, %c0_0] : memref<8x13xf32, #tpu.memory_space<vmem>>, vector<8x13xf32>
    %c0_1 = arith.constant 0 : index
    %c0_2 = arith.constant 0 : index
    %1 = vector.load %arg2[%c0_1, %c0_2] : memref<13x10xf32, #tpu.memory_space<vmem>>, vector<13x10xf32>
    %cst = arith.constant dense<0.000000e+00> : vector<8x10xf32>
    %2 = tpu.matmul %0, %1, %cst {dimension_numbers = #tpu.dot_dimension_numbers<[1], [0], [0], [1], [0, 0, 1, 1], [], []>} : vector<8x13xf32>, vector<13x10xf32>, vector<8x10xf32> -> vector<8x10xf32>
    %c0_3 = arith.constant 0 : index
    %c0_4 = arith.constant 0 : index
    %3 = vector.load %arg3[%c0_3, %c0_4] : memref<1x10xf32, #tpu.memory_space<vmem>>, vector<1x10xf32>
    %4 = vector.broadcast %3 : vector<1x10xf32> to vector<8x10xf32>
    %5 = arith.addf %2, %4 : vector<8x10xf32>
    %cst_5 = arith.constant 0.000000e+00 : f32
    %6 = vector.broadcast %cst_5 : f32 to vector<8x10xf32>
    %7 = arith.maximumf %5, %6 : vector<8x10xf32>
    %c0_6 = arith.constant 0 : index
    %c0_7 = arith.constant 0 : index
    %8 = vector.load %arg4[%c0_6, %c0_7] : memref<10x32xf32, #tpu.memory_space<vmem>>, vector<10x32xf32>
    %cst_8 = arith.constant dense<0.000000e+00> : vector<8x32xf32>
    %9 = tpu.matmul %7, %8, %cst_8 {dimension_numbers = #tpu.dot_dimension_numbers<[1], [0], [0], [1], [0, 0, 1, 1], [], []>} : vector<8x10xf32>, vector<10x32xf32>, vector<8x32xf32> -> vector<8x32xf32>
    %c0_9 = arith.constant 0 : index
    %c0_10 = arith.constant 0 : index
    %10 = vector.load %arg5[%c0_9, %c0_10] : memref<1x32xf32, #tpu.memory_space<vmem>>, vector<1x32xf32>
    %11 = vector.broadcast %10 : vector<1x32xf32> to vector<8x32xf32>
    %12 = arith.addf %9, %11 : vector<8x32xf32>
    %cst_11 = arith.constant 0.000000e+00 : f32
    %13 = vector.broadcast %cst_11 : f32 to vector<8x32xf32>
    %14 = arith.maximumf %12, %13 : vector<8x32xf32>
    %c0_12 = arith.constant 0 : index
    %c0_13 = arith.constant 0 : index
    %15 = vector.load %arg6[%c0_12, %c0_13] : memref<32x32xf32, #tpu.memory_space<vmem>>, vector<32x32xf32>
    %cst_14 = arith.constant dense<0.000000e+00> : vector<8x32xf32>
    %16 = tpu.matmul %14, %15, %cst_14 {dimension_numbers = #tpu.dot_dimension_numbers<[1], [0], [0], [1], [0, 0, 1, 1], [], []>} : vector<8x32xf32>, vector<32x32xf32>, vector<8x32xf32> -> vector<8x32xf32>
    %c0_15 = arith.constant 0 : index
    %c0_16 = arith.constant 0 : index
    %17 = vector.load %arg7[%c0_15, %c0_16] : memref<1x32xf32, #tpu.memory_space<vmem>>, vector<1x32xf32>
    %18 = vector.broadcast %17 : vector<1x32xf32> to vector<8x32xf32>
    %19 = arith.addf %16, %18 : vector<8x32xf32>
    %cst_17 = arith.constant 0.000000e+00 : f32
    %20 = vector.broadcast %cst_17 : f32 to vector<8x32xf32>
    %21 = arith.maximumf %19, %20 : vector<8x32xf32>
    %c0_18 = arith.constant 0 : index
    %c0_19 = arith.constant 0 : index
    %22 = vector.load %arg8[%c0_18, %c0_19] : memref<32x8xf32, #tpu.memory_space<vmem>>, vector<32x8xf32>
    %cst_20 = arith.constant dense<0.000000e+00> : vector<8x8xf32>
    %23 = tpu.matmul %21, %22, %cst_20 {dimension_numbers = #tpu.dot_dimension_numbers<[1], [0], [0], [1], [0, 0, 1, 1], [], []>} : vector<8x32xf32>, vector<32x8xf32>, vector<8x8xf32> -> vector<8x8xf32>
    %c0_21 = arith.constant 0 : index
    %c0_22 = arith.constant 0 : index
    %24 = vector.load %arg9[%c0_21, %c0_22] : memref<1x8xf32, #tpu.memory_space<vmem>>, vector<1x8xf32>
    %25 = vector.broadcast %24 : vector<1x8xf32> to vector<8x8xf32>
    %26 = arith.addf %23, %25 : vector<8x8xf32>
    %27 = arith.negf %26 : vector<8x8xf32>
    %28 = math.exp %27 : vector<8x8xf32>
    %cst_23 = arith.constant 1.000000e+00 : f32
    %29 = vector.broadcast %cst_23 : f32 to vector<8x8xf32>
    %30 = arith.addf %29, %28 : vector<8x8xf32>
    %31 = arith.divf %29, %30 : vector<8x8xf32>
    %c0_24 = arith.constant 0 : index
    %c0_25 = arith.constant 0 : index
    %32 = vector.load %arg10[%c0_24, %c0_25] : memref<8x8xf32, #tpu.memory_space<vmem>>, vector<8x8xf32>
    tpu.vector_store %arg10[%c0_24, %c0_25], %31 {strides = array<i32>} : memref<8x8xf32, #tpu.memory_space<vmem>>, vector<8x8xf32>,
    return
  }
  func.func @transform_0(%arg0: i32) -> (i32, i32) {
    %c0_i32 = arith.constant 0 : i32
    %c0_i32_0 = arith.constant 0 : i32
    return %arg0, %c0_i32 : i32, i32
  }
  func.func @transform_1(%arg0: i32) -> (i32, i32) {
    %c0_i32 = arith.constant 0 : i32
    %c0_i32_0 = arith.constant 0 : i32
    %c0_i32_1 = arith.constant 0 : i32
    return %c0_i32, %c0_i32_0 : i32, i32
  }
  func.func @transform_2(%arg0: i32) -> (i32, i32) {
    %c0_i32 = arith.constant 0 : i32
    %c0_i32_0 = arith.constant 0 : i32
    %c0_i32_1 = arith.constant 0 : i32
    return %c0_i32, %c0_i32_0 : i32, i32
  }
  func.func @transform_3(%arg0: i32) -> (i32, i32) {
    %c0_i32 = arith.constant 0 : i32
    %c0_i32_0 = arith.constant 0 : i32
    %c0_i32_1 = arith.constant 0 : i32
    return %c0_i32, %c0_i32_0 : i32, i32
  }
  func.func @transform_4(%arg0: i32) -> (i32, i32) {
    %c0_i32 = arith.constant 0 : i32
    %c0_i32_0 = arith.constant 0 : i32
    %c0_i32_1 = arith.constant 0 : i32
    return %c0_i32, %c0_i32_0 : i32, i32
  }
  func.func @transform_5(%arg0: i32) -> (i32, i32) {
    %c0_i32 = arith.constant 0 : i32
    %c0_i32_0 = arith.constant 0 : i32
    %c0_i32_1 = arith.constant 0 : i32
    return %c0_i32, %c0_i32_0 : i32, i32
  }
  func.func @transform_6(%arg0: i32) -> (i32, i32) {
    %c0_i32 = arith.constant 0 : i32
    %c0_i32_0 = arith.constant 0 : i32
    %c0_i32_1 = arith.constant 0 : i32
    return %c0_i32, %c0_i32_0 : i32, i32
  }
  func.func @transform_7(%arg0: i32) -> (i32, i32) {
    %c0_i32 = arith.constant 0 : i32
    %c0_i32_0 = arith.constant 0 : i32
    %c0_i32_1 = arith.constant 0 : i32
    return %c0_i32, %c0_i32_0 : i32, i32
  }
  func.func @transform_8(%arg0: i32) -> (i32, i32) {
    %c0_i32 = arith.constant 0 : i32
    %c0_i32_0 = arith.constant 0 : i32
    %c0_i32_1 = arith.constant 0 : i32
    return %c0_i32, %c0_i32_0 : i32, i32
  }
  func.func @transform_9(%arg0: i32) -> (i32, i32) {
    %c0_i32 = arith.constant 0 : i32
    %c0_i32_0 = arith.constant 0 : i32
    return %arg0, %c0_i32 : i32, i32
  }
}

</mosaic_0001>

<llo_original>
// kernel: tpu_custom_call.1
$region0: #{tpu_custom_call.1}
  #allocation0 [shape = 'u32[]', space=smem, size = 0x4, offset = 0x4, fixed_abs, tag = 'smem constant byte address 0x4 - core index']
  #allocation1 [shape = 'u32[144,128]{1,0:T(1,128)}', space=vmem, size = 0x12000, scoped, tag = 'internal scratch']
  %s0 = inlined_call_operand.hbm [shape: f32[8,13], index: 0, kind: input, shape index: {}]
  %s1 = inlined_call_operand.vmem [shape: f32[13,10], index: 1, kind: input, shape index: {}]
  %s2 = inlined_call_operand.vmem [shape: f32[1,10], index: 2, kind: input, shape index: {}]
  %s3 = inlined_call_operand.hbm [shape: f32[10,32], index: 3, kind: input, shape index: {}]
  %s4 = inlined_call_operand.vmem [shape: f32[1,32], index: 4, kind: input, shape index: {}]
  %s5 = inlined_call_operand.vmem [shape: f32[32,32], index: 5, kind: input, shape index: {}]
  %s6 = inlined_call_operand.vmem [shape: f32[1,32], index: 6, kind: input, shape index: {}]
  %s7 = inlined_call_operand.vmem [shape: f32[32,8], index: 7, kind: input, shape index: {}]
  %s8 = inlined_call_operand.vmem [shape: f32[1,8], index: 8, kind: input, shape index: {}]
  %s9 = inlined_call_operand.hbm [shape: f32[8,8], index: 9, kind: output, shape index: {}]
  %s10 = sld [smem:[#allocation0]]
  $region54: #{tpu_custom_call.1} parent=0
    _
  %s12 = ssub.s32 1, %s10
  %s13 = scalar_select 0, %s12, %s10
  $region1: #{tpu_custom_call.1} parent=0
    #allocation2 [shape = 'u8[4096]{0}', space=vmem, size = 0x1000, scoped, tag = 'input window, operand 0, single buffered']
    #allocation3 [shape = 's32[1]{0}', space=sflag, size = 0x4, scoped, tag = 'scoped memory for tpu_custom_call.1']
    #allocation4 [shape = 's32[1]{0}', space=sflag, size = 0x4, scoped, tag = 'scoped memory for tpu_custom_call.1']
    #allocation5 [shape = 'u8[8192]{0}', space=vmem, size = 0x2000, scoped, tag = 'input window, operand 3, single buffered']
    #allocation6 [shape = 's32[1]{0}', space=sflag, size = 0x4, scoped, tag = 'scoped memory for tpu_custom_call.1']
    #allocation7 [shape = 'u8[4096]{0}', space=vmem, size = 0x1000, scoped, tag = 'output window, operand 0, single buffered']
    %14 = vsyncpa [#allocation3], 0
    %15 = vsyncpa [#allocation6], 0
    %16 = vsyncpa [#allocation4], 0
    // Predicated region
    $region2: #{tpu_custom_call.1} parent=1 // pred_check
      _
    $region3: #{tpu_custom_call.1} parent=1 // pred_check_branch
      %18 = sbr.rel (0) target = $region5
    $region4: #{tpu_custom_call.1} parent=1 // pred_region
      %s20 = ssub.s32 128, 128
      %21 = vsyncadd [#allocation3], %s20
      %s23 = sshll.u32 [#allocation2], 4
      %s24 = int_to_ptr.vmem [resolvable:$true] %s23
      %26 = dma.hbm_to_vmem [thread:$0]  %s0, 128, %s24, [#allocation3]
    $region5: #{tpu_custom_call.1} parent=1 // pred_fallthru
      _
    // Predicated region
    $region6: #{tpu_custom_call.1} parent=1 // pred_check
      _
    $region7: #{tpu_custom_call.1} parent=1 // pred_check_branch
      %28 = sbr.rel (0) target = $region9
    $region8: #{tpu_custom_call.1} parent=1 // pred_region
      _
    $region9: #{tpu_custom_call.1} parent=1 // pred_fallthru
      _
    // Predicated region
    $region10: #{tpu_custom_call.1} parent=1 // pred_check
      _
    $region11: #{tpu_custom_call.1} parent=1 // pred_check_branch
      %30 = sbr.rel (0) target = $region13
    $region12: #{tpu_custom_call.1} parent=1 // pred_region
      _
    $region13: #{tpu_custom_call.1} parent=1 // pred_fallthru
      _
    // Predicated region
    $region14: #{tpu_custom_call.1} parent=1 // pred_check
      _
    $region15: #{tpu_custom_call.1} parent=1 // pred_check_branch
      %32 = sbr.rel (0) target = $region17
    $region16: #{tpu_custom_call.1} parent=1 // pred_region
      %s34 = ssub.s32 256, 256
      %35 = vsyncadd [#allocation6], %s34
      %s36 = sshll.u32 [#allocation5], 4
      %s37 = int_to_ptr.vmem [resolvable:$true] %s36
      %42 = dma.hbm_to_vmem [thread:$0]  %s3, 256, %s37, [#allocation6], 128, 128, 8
    $region17: #{tpu_custom_call.1} parent=1 // pred_fallthru
      _
    // Predicated region
    $region18: #{tpu_custom_call.1} parent=1 // pred_check
      _
    $region19: #{tpu_custom_call.1} parent=1 // pred_check_branch
      %44 = sbr.rel (0) target = $region21
    $region20: #{tpu_custom_call.1} parent=1 // pred_region
      _
    $region21: #{tpu_custom_call.1} parent=1 // pred_fallthru
      _
    // Predicated region
    $region22: #{tpu_custom_call.1} parent=1 // pred_check
      _
    $region23: #{tpu_custom_call.1} parent=1 // pred_check_branch
      %46 = sbr.rel (0) target = $region25
    $region24: #{tpu_custom_call.1} parent=1 // pred_region
      _
    $region25: #{tpu_custom_call.1} parent=1 // pred_fallthru
      _
    // Predicated region
    $region26: #{tpu_custom_call.1} parent=1 // pred_check
      _
    $region27: #{tpu_custom_call.1} parent=1 // pred_check_branch
      %48 = sbr.rel (0) target = $region29
    $region28: #{tpu_custom_call.1} parent=1 // pred_region
      _
    $region29: #{tpu_custom_call.1} parent=1 // pred_fallthru
      _
    // Predicated region
    $region30: #{tpu_custom_call.1} parent=1 // pred_check
      _
    $region31: #{tpu_custom_call.1} parent=1 // pred_check_branch
      %50 = sbr.rel (0) target = $region33
    $region32: #{tpu_custom_call.1} parent=1 // pred_region
      _
    $region33: #{tpu_custom_call.1} parent=1 // pred_fallthru
      _
    // Predicated region
    $region34: #{tpu_custom_call.1} parent=1 // pred_check
      _
    $region35: #{tpu_custom_call.1} parent=1 // pred_check_branch
      %52 = sbr.rel (0) target = $region37
    $region36: #{tpu_custom_call.1} parent=1 // pred_region
      _
    $region37: #{tpu_custom_call.1} parent=1 // pred_fallthru
      _
    // Predicated region
    $region38: #{tpu_custom_call.1} parent=1 // pred_check
      _
    $region39: #{tpu_custom_call.1} parent=1 // pred_check_branch
      %54 = sbr.rel (0) target = $region41
    $region40: #{tpu_custom_call.1} parent=1 // pred_region
      %55 = dma.done [#allocation3], 128
    $region41: #{tpu_custom_call.1} parent=1 // pred_fallthru
      _
    // Predicated region
    $region42: #{tpu_custom_call.1} parent=1 // pred_check
      _
    $region43: #{tpu_custom_call.1} parent=1 // pred_check_branch
      %57 = sbr.rel (0) target = $region45
    $region44: #{tpu_custom_call.1} parent=1 // pred_region
      %58 = dma.done [#allocation6], 256
    $region45: #{tpu_custom_call.1} parent=1 // pred_fallthru
      _
    %v59 = vld [vmem:[#allocation2] sm:$0xff]
    %v60 = vld [vmem:[%s1] sm:$0xff]
    %v61 = vld [vmem:[%s1 + $0x8] sm:$0x1f]
    %v62 = vld [vmem:[%s2] sm:$0x1]
    %v64 = vlaneseq
    %v65 = vshrl.u32 %v64, 7
    %v66 = vsub.s32 0, %v65
    %v67 = vrot.slane %v62, %v66
    %vm69 = vcmask 105472
    %v71 = vsel %vm69, %v59, 0
    %vm73 = vcmask 1044480
    %v75 = vsel %vm73, %v61, 0
    %77 = vmatprep.subr.mxu0 0.0
    %78 = vmatpush1.msra.mxu0 %v60
    %79 = vmatprep.subr.mxu0 0.0
    %80 = vmatpush1.msra.mxu0 %v75
    %81 = vmatprep.subr.mxu0 0.0
    %82 = vmatpush1.msra.mxu0 0.0
    %83 = vmatprep.subr.mxu0 0.0
    %84 = vmatpush1.msra.mxu0 0.0
    %85 = vmatprep.subr.mxu0 0.0
    %86 = vmatpush1.msra.mxu0 0.0
    %87 = vmatprep.subr.mxu0 0.0
    %88 = vmatpush1.msra.mxu0 0.0
    %89 = vmatprep.subr.mxu0 0.0
    %90 = vmatpush1.msra.mxu0 0.0
    %91 = vmatprep.subr.mxu0 0.0
    %92 = vmatpush1.msra.mxu0 0.0
    %93 = vmatprep.subr.mxu0 0.0
    %94 = vmatpush1.msra.mxu0 0.0
    %95 = vmatprep.subr.mxu0 0.0
    %96 = vmatpush1.msra.mxu0 0.0
    %97 = vmatprep.subr.mxu0 0.0
    %98 = vmatpush1.msra.mxu0 0.0
    %99 = vmatprep.subr.mxu0 0.0
    %100 = vmatpush1.msra.mxu0 0.0
    %101 = vmatprep.subr.mxu0 0.0
    %102 = vmatpush1.msra.mxu0 0.0
    %103 = vmatprep.subr.mxu0 0.0
    %104 = vmatpush1.msra.mxu0 0.0
    %105 = vmatprep.subr.mxu0 0.0
    %106 = vmatpush1.msra.mxu0 0.0
    %107 = vmatprep.subr.mxu0 0.0
    %108 = vmatpush1.msra.mxu0 0.0
    %109 = vmatprep.subr.mxu0 0.0
    %110 = vmatpush1.msra.mxu0 0.0
    %111 = vmatprep.subr.mxu0 0.0
    %112 = vmatpush1.msra.mxu0 0.0
    %113 = vmatprep.subr.mxu0 0.0
    %114 = vmatpush1.msra.mxu0 0.0
    %115 = vmatprep.subr.mxu0 0.0
    %116 = vmatpush1.msra.mxu0 0.0
    %117 = vmatprep.subr.mxu0 0.0
    %118 = vmatpush1.msra.mxu0 0.0
    %119 = vmatprep.subr.mxu0 0.0
    %120 = vmatpush1.msra.mxu0 0.0
    %121 = vmatprep.subr.mxu0 0.0
    %122 = vmatpush1.msra.mxu0 0.0
    %123 = vmatprep.subr.mxu0 0.0
    %124 = vmatpush1.msra.mxu0 0.0
    %125 = vmatprep.subr.mxu0 0.0
    %126 = vmatpush1.msra.mxu0 0.0
    %127 = vmatprep.subr.mxu0 0.0
    %128 = vmatpush1.msra.mxu0 0.0
    %129 = vmatprep.subr.mxu0 0.0
    %130 = vmatpush1.msra.mxu0 0.0
    %131 = vmatprep.subr.mxu0 0.0
    %132 = vmatpush1.msra.mxu0 0.0
    %133 = vmatprep.subr.mxu0 0.0
    %134 = vmatpush1.msra.mxu0 0.0
    %135 = vmatprep.subr.mxu0 0.0
    %136 = vmatpush1.msra.mxu0 0.0
    %137 = vmatprep.subr.mxu0 0.0
    %138 = vmatpush1.msra.mxu0 0.0
    %139 = vmatprep.subr.mxu0 0.0
    %140 = vmatpush1.msra.mxu0 0.0
    %141 = vmatprep.mubr.f32.mxu0 0.0
    %142 = vmatmul.mubr.f32.gmra.mrb[0].mxu0 %v71
    %v143 = vpop.f32.mrb[0].mxu0
    %v144 = vadd.f32 %v67, %v143
    %v145 = vpop.f32.mrb[0].mxu0
    %146 = vdwg.mxu0
    %v147 = vmax.f32 %v144, 0.0
    %v148 = vld [vmem:[#allocation5] sm:$0xff]
    %v149 = vld [vmem:[#allocation5 + $0x8] sm:$0x3]
    %v150 = vld [vmem:[%s4] sm:$0x1]
    %v152 = vlaneseq
    %v153 = vshrl.u32 %v152, 7
    %v154 = vsub.s32 0, %v153
    %v155 = vrot.slane %v150, %v154
    %vm157 = vcmask 80896
    %v159 = vsel %vm157, %v147, 0
    %vm161 = vcmask 1041408
    %v163 = vsel %vm161, %v149, 0
    %165 = vmatprep.subr.mxu0 0.0
    %166 = vmatpush1.msra.mxu0 %v148
    %167 = vmatprep.subr.mxu0 0.0
    %168 = vmatpush1.msra.mxu0 %v163
    %169 = vmatprep.subr.mxu0 0.0
    %170 = vmatpush1.msra.mxu0 0.0
    %171 = vmatprep.subr.mxu0 0.0
    %172 = vmatpush1.msra.mxu0 0.0
    %173 = vmatprep.subr.mxu0 0.0
    %174 = vmatpush1.msra.mxu0 0.0
    %175 = vmatprep.subr.mxu0 0.0
    %176 = vmatpush1.msra.mxu0 0.0
    %177 = vmatprep.subr.mxu0 0.0
    %178 = vmatpush1.msra.mxu0 0.0
    %179 = vmatprep.subr.mxu0 0.0
    %180 = vmatpush1.msra.mxu0 0.0
    %181 = vmatprep.subr.mxu0 0.0
    %182 = vmatpush1.msra.mxu0 0.0
    %183 = vmatprep.subr.mxu0 0.0
    %184 = vmatpush1.msra.mxu0 0.0
    %185 = vmatprep.subr.mxu0 0.0
    %186 = vmatpush1.msra.mxu0 0.0
    %187 = vmatprep.subr.mxu0 0.0
    %188 = vmatpush1.msra.mxu0 0.0
    %189 = vmatprep.subr.mxu0 0.0
    %190 = vmatpush1.msra.mxu0 0.0
    %191 = vmatprep.subr.mxu0 0.0
    %192 = vmatpush1.msra.mxu0 0.0
    %193 = vmatprep.subr.mxu0 0.0
    %194 = vmatpush1.msra.mxu0 0.0
    %195 = vmatprep.subr.mxu0 0.0
    %196 = vmatpush1.msra.mxu0 0.0
    %197 = vmatprep.subr.mxu0 0.0
    %198 = vmatpush1.msra.mxu0 0.0
    %199 = vmatprep.subr.mxu0 0.0
    %200 = vmatpush1.msra.mxu0 0.0
    %201 = vmatprep.subr.mxu0 0.0
    %202 = vmatpush1.msra.mxu0 0.0
    %203 = vmatprep.subr.mxu0 0.0
    %204 = vmatpush1.msra.mxu0 0.0
    %205 = vmatprep.subr.mxu0 0.0
    %206 = vmatpush1.msra.mxu0 0.0
    %207 = vmatprep.subr.mxu0 0.0
    %208 = vmatpush1.msra.mxu0 0.0
    %209 = vmatprep.subr.mxu0 0.0
    %210 = vmatpush1.msra.mxu0 0.0
    %211 = vmatprep.subr.mxu0 0.0
    %212 = vmatpush1.msra.mxu0 0.0
    %213 = vmatprep.subr.mxu0 0.0
    %214 = vmatpush1.msra.mxu0 0.0
    %215 = vmatprep.subr.mxu0 0.0
    %216 = vmatpush1.msra.mxu0 0.0
    %217 = vmatprep.subr.mxu0 0.0
    %218 = vmatpush1.msra.mxu0 0.0
    %219 = vmatprep.subr.mxu0 0.0
    %220 = vmatpush1.msra.mxu0 0.0
    %221 = vmatprep.subr.mxu0 0.0
    %222 = vmatpush1.msra.mxu0 0.0
    %223 = vmatprep.subr.mxu0 0.0
    %224 = vmatpush1.msra.mxu0 0.0
    %225 = vmatprep.subr.mxu0 0.0
    %226 = vmatpush1.msra.mxu0 0.0
    %227 = vmatprep.subr.mxu0 0.0
    %228 = vmatpush1.msra.mxu0 0.0
    %229 = vmatprep.mubr.f32.mxu0 0.0
    %230 = vmatmul.mubr.f32.gmra.mrb[0].mxu0 %v159
    %v231 = vpop.f32.mrb[0].mxu0
    %v232 = vadd.f32 %v155, %v231
    %v233 = vpop.f32.mrb[0].mxu0
    %234 = vdwg.mxu0
    %v235 = vmax.f32 %v232, 0.0
    %v236 = vld [vmem:[%s5] sm:$0xff]
    %v237 = vld [vmem:[%s5 + $0x8] sm:$0xff]
    %v238 = vld [vmem:[%s5 + $0x10] sm:$0xff]
    %v239 = vld [vmem:[%s5 + $0x18] sm:$0xff]
    %v240 = vld [vmem:[%s6] sm:$0x1]
    %v242 = vlaneseq
    %v243 = vshrl.u32 %v242, 7
    %v244 = vsub.s32 0, %v243
    %v245 = vrot.slane %v240, %v244
    %vm247 = vcmask 261120
    %v249 = vsel %vm247, %v235, 0
    %251 = vmatprep.subr.mxu0 0.0
    %252 = vmatpush1.msra.mxu0 %v236
    %253 = vmatprep.subr.mxu0 0.0
    %254 = vmatpush1.msra.mxu0 %v237
    %255 = vmatprep.subr.mxu0 0.0
    %256 = vmatpush1.msra.mxu0 %v238
    %257 = vmatprep.subr.mxu0 0.0
    %258 = vmatpush1.msra.mxu0 %v239
    %259 = vmatprep.subr.mxu0 0.0
    %260 = vmatpush1.msra.mxu0 0.0
    %261 = vmatprep.subr.mxu0 0.0
    %262 = vmatpush1.msra.mxu0 0.0
    %263 = vmatprep.subr.mxu0 0.0
    %264 = vmatpush1.msra.mxu0 0.0
    %265 = vmatprep.subr.mxu0 0.0
    %266 = vmatpush1.msra.mxu0 0.0
    %267 = vmatprep.subr.mxu0 0.0
    %268 = vmatpush1.msra.mxu0 0.0
    %269 = vmatprep.subr.mxu0 0.0
    %270 = vmatpush1.msra.mxu0 0.0
    %271 = vmatprep.subr.mxu0 0.0
    %272 = vmatpush1.msra.mxu0 0.0
    %273 = vmatprep.subr.mxu0 0.0
    %274 = vmatpush1.msra.mxu0 0.0
    %275 = vmatprep.subr.mxu0 0.0
    %276 = vmatpush1.msra.mxu0 0.0
    %277 = vmatprep.subr.mxu0 0.0
    %278 = vmatpush1.msra.mxu0 0.0
    %279 = vmatprep.subr.mxu0 0.0
    %280 = vmatpush1.msra.mxu0 0.0
    %281 = vmatprep.subr.mxu0 0.0
    %282 = vmatpush1.msra.mxu0 0.0
    %283 = vmatprep.subr.mxu0 0.0
    %284 = vmatpush1.msra.mxu0 0.0
    %285 = vmatprep.subr.mxu0 0.0
    %286 = vmatpush1.msra.mxu0 0.0
    %287 = vmatprep.subr.mxu0 0.0
    %288 = vmatpush1.msra.mxu0 0.0
    %289 = vmatprep.subr.mxu0 0.0
    %290 = vmatpush1.msra.mxu0 0.0
    %291 = vmatprep.subr.mxu0 0.0
    %292 = vmatpush1.msra.mxu0 0.0
    %293 = vmatprep.subr.mxu0 0.0
    %294 = vmatpush1.msra.mxu0 0.0
    %295 = vmatprep.subr.mxu0 0.0
    %296 = vmatpush1.msra.mxu0 0.0
    %297 = vmatprep.subr.mxu0 0.0
    %298 = vmatpush1.msra.mxu0 0.0
    %299 = vmatprep.subr.mxu0 0.0
    %300 = vmatpush1.msra.mxu0 0.0
    %301 = vmatprep.subr.mxu0 0.0
    %302 = vmatpush1.msra.mxu0 0.0
    %303 = vmatprep.subr.mxu0 0.0
    %304 = vmatpush1.msra.mxu0 0.0
    %305 = vmatprep.subr.mxu0 0.0
    %306 = vmatpush1.msra.mxu0 0.0
    %307 = vmatprep.subr.mxu0 0.0
    %308 = vmatpush1.msra.mxu0 0.0
    %309 = vmatprep.subr.mxu0 0.0
    %310 = vmatpush1.msra.mxu0 0.0
    %311 = vmatprep.subr.mxu0 0.0
    %312 = vmatpush1.msra.mxu0 0.0
    %313 = vmatprep.subr.mxu0 0.0
    %314 = vmatpush1.msra.mxu0 0.0
    %315 = vmatprep.mubr.f32.mxu0 0.0
    %316 = vmatmul.mubr.f32.gmra.mrb[0].mxu0 %v249
    %v317 = vpop.f32.mrb[0].mxu0
    %v318 = vadd.f32 %v245, %v317
    %v319 = vpop.f32.mrb[0].mxu0
    %320 = vdwg.mxu0
    %v321 = vmax.f32 %v318, 0.0
    %v322 = vld [vmem:[%s7] sm:$0xff]
    %v323 = vld [vmem:[%s7 + $0x8] sm:$0xff]
    %v324 = vld [vmem:[%s7 + $0x10] sm:$0xff]
    %v325 = vld [vmem:[%s7 + $0x18] sm:$0xff]
    %v326 = vld [vmem:[%s8] sm:$0x1]
    %v328 = vlaneseq
    %v329 = vshrl.u32 %v328, 7
    %v330 = vsub.s32 0, %v329
    %v331 = vrot.slane %v326, %v330
    %v334 = vsel %vm247, %v321, 0
    %336 = vmatprep.subr.mxu0 0.0
    %337 = vmatpush1.msra.mxu0 %v322
    %338 = vmatprep.subr.mxu0 0.0
    %339 = vmatpush1.msra.mxu0 %v323
    %340 = vmatprep.subr.mxu0 0.0
    %341 = vmatpush1.msra.mxu0 %v324
    %342 = vmatprep.subr.mxu0 0.0
    %343 = vmatpush1.msra.mxu0 %v325
    %344 = vmatprep.subr.mxu0 0.0
    %345 = vmatpush1.msra.mxu0 0.0
    %346 = vmatprep.subr.mxu0 0.0
    %347 = vmatpush1.msra.mxu0 0.0
    %348 = vmatprep.subr.mxu0 0.0
    %349 = vmatpush1.msra.mxu0 0.0
    %350 = vmatprep.subr.mxu0 0.0
    %351 = vmatpush1.msra.mxu0 0.0
    %352 = vmatprep.subr.mxu0 0.0
    %353 = vmatpush1.msra.mxu0 0.0
    %354 = vmatprep.subr.mxu0 0.0
    %355 = vmatpush1.msra.mxu0 0.0
    %356 = vmatprep.subr.mxu0 0.0
    %357 = vmatpush1.msra.mxu0 0.0
    %358 = vmatprep.subr.mxu0 0.0
    %359 = vmatpush1.msra.mxu0 0.0
    %360 = vmatprep.subr.mxu0 0.0
    %361 = vmatpush1.msra.mxu0 0.0
    %362 = vmatprep.subr.mxu0 0.0
    %363 = vmatpush1.msra.mxu0 0.0
    %364 = vmatprep.subr.mxu0 0.0
    %365 = vmatpush1.msra.mxu0 0.0
    %366 = vmatprep.subr.mxu0 0.0
    %367 = vmatpush1.msra.mxu0 0.0
    %368 = vmatprep.subr.mxu0 0.0
    %369 = vmatpush1.msra.mxu0 0.0
    %370 = vmatprep.subr.mxu0 0.0
    %371 = vmatpush1.msra.mxu0 0.0
    %372 = vmatprep.subr.mxu0 0.0
    %373 = vmatpush1.msra.mxu0 0.0
    %374 = vmatprep.subr.mxu0 0.0
    %375 = vmatpush1.msra.mxu0 0.0
    %376 = vmatprep.subr.mxu0 0.0
    %377 = vmatpush1.msra.mxu0 0.0
    %378 = vmatprep.subr.mxu0 0.0
    %379 = vmatpush1.msra.mxu0 0.0
    %380 = vmatprep.subr.mxu0 0.0
    %381 = vmatpush1.msra.mxu0 0.0
    %382 = vmatprep.subr.mxu0 0.0
    %383 = vmatpush1.msra.mxu0 0.0
    %384 = vmatprep.subr.mxu0 0.0
    %385 = vmatpush1.msra.mxu0 0.0
    %386 = vmatprep.subr.mxu0 0.0
    %387 = vmatpush1.msra.mxu0 0.0
    %388 = vmatprep.subr.mxu0 0.0
    %389 = vmatpush1.msra.mxu0 0.0
    %390 = vmatprep.subr.mxu0 0.0
    %391 = vmatpush1.msra.mxu0 0.0
    %392 = vmatprep.subr.mxu0 0.0
    %393 = vmatpush1.msra.mxu0 0.0
    %394 = vmatprep.subr.mxu0 0.0
    %395 = vmatpush1.msra.mxu0 0.0
    %396 = vmatprep.subr.mxu0 0.0
    %397 = vmatpush1.msra.mxu0 0.0
    %398 = vmatprep.subr.mxu0 0.0
    %399 = vmatpush1.msra.mxu0 0.0
    %400 = vmatprep.mubr.f32.mxu0 0.0
    %401 = vmatmul.mubr.f32.gmra.mrb[0].mxu0 %v334
    %v402 = vpop.f32.mrb[0].mxu0
    %v403 = vadd.f32 %v331, %v402
    %v404 = vpop.f32.mrb[0].mxu0
    %405 = vdwg.mxu0
    %v406 = vxor.u32 %v403, 2147483648
    %v407 = vmul.f32 %v406, 1.442695
    %v408 = vpow.pop %v407
    %v409 = vadd.f32 %v408, 1.0
    %v410 = vrcp.pop %v409
    %v411 = vmul.f32 1.0, %v410
    %vm412 = vcmask 64512
    %413 = vst.msk [vmem:[#allocation7] sm:$0xff] %vm412, %v411
    // Predicated region
    $region46: #{tpu_custom_call.1} parent=1 // pred_check
      _
    $region47: #{tpu_custom_call.1} parent=1 // pred_check_branch
      %415 = sbr.rel (0) target = $region49
    $region48: #{tpu_custom_call.1} parent=1 // pred_region
      %s417 = ssub.s32 128, 128
      %418 = vsyncadd [#allocation4], %s417
      %s420 = sshll.u32 [#allocation7], 4
      %s421 = int_to_ptr.vmem [resolvable:$true] %s420
      %423 = dma.vmem_to_hbm [thread:$0]  %s421, 128, %s9, [#allocation4]
    $region49: #{tpu_custom_call.1} parent=1 // pred_fallthru
      _
    // Predicated region
    $region50: #{tpu_custom_call.1} parent=1 // pred_check
      _
    $region51: #{tpu_custom_call.1} parent=1 // pred_check_branch
      %425 = sbr.rel (0) target = $region53
    $region52: #{tpu_custom_call.1} parent=1 // pred_region
      %426 = dma.done [#allocation4], 128
    $region53: #{tpu_custom_call.1} parent=1 // pred_fallthru
      _
    %427 = vsyncpa [#allocation3], 1
    %428 = vsyncpa [#allocation6], 1
    %429 = vsyncpa [#allocation4], 1

</llo_original>
